<compile_context>
chip_gen: v5e
topology: v5e:2x2
jax: 0.10.0
libtpu: 0.0.40
codegen_flags: <defaults>
</compile_context>

<pallas_src>
import functools

import jax
import jax.numpy as jnp
import numpy as np
from jax import lax
from jax.experimental import pallas as pl
from jax.experimental.pallas import tpu as pltpu

NEG_SLOPE = 0.3          # leaky_relu negative slope used in the torch forward
DROP_P = 0.3             # F.dropout(p=0.3) -- training=True by default in F.dropout
KEEP_P = 1.0 - DROP_P
# keep an element iff (top 24 bits of its hash) < KEEP_P * 2^24
_KEEP_THRESH24 = np.int32(int(round(KEEP_P * (1 << 24))))

LAYER_SIZES = [8, 32, 64, 128, 64, 30]


def _mix32(x):
    """splitmix32-style finalizer on uint32 values (portable counter PRNG)."""
    x = x ^ (x >> 16)
    x = x * np.uint32(0x7FEB352D)
    x = x ^ (x >> 15)
    x = x * np.uint32(0x846CA68B)
    x = x ^ (x >> 16)
    return x


def _mlp_kernel(seed_ref, x_ref,
                w1, b1, w2, b2, w3, b3, w4, b4, w5, b5,
                o_ref, *, training: bool):
    """Whole MLP forward for one batch tile, entirely in VMEM."""
    tile_b = x_ref.shape[0]
    row_base = pl.program_id(0) * tile_b            # global row offset of this tile
    seed_u = seed_ref[0].astype(jnp.uint32)

    def dense(h, w_ref, b_ref):
        w = w_ref[...]
        acc = jnp.dot(h.astype(w.dtype), w, preferred_element_type=jnp.float32)
        return acc + b_ref[...]

    def act_drop(h, layer_idx):
        # Fused leaky_relu(0.3) + inverted dropout: one select for the activation,
        # one select for the keep/scale multiplier.
        act = jnp.where(h > 0, h, NEG_SLOPE * h)
        if not training:
            return act
        # Counter-based hash PRNG: unique 32-bit counter per (global row, column),
        # mixed with a per-(seed, layer) key. Distributionally equivalent to
        # torch dropout (different bitstream), deterministic, works everywhere.
        rows = lax.broadcasted_iota(jnp.int32, h.shape, 0) + row_base
        cols = lax.broadcasted_iota(jnp.int32, h.shape, 1)
        ctr = (rows * 128 + cols).astype(jnp.uint32)          # widths <= 128
        layer_key = np.uint32((layer_idx * 0x9E3779B9) & 0xFFFFFFFF)
        key = _mix32(seed_u + layer_key)
        bits = _mix32(ctr ^ key)
        keep = (bits >> 8).astype(jnp.int32) < _KEEP_THRESH24
        scale = jnp.where(keep, np.float32(1.0 / KEEP_P), np.float32(0.0))
        return act * scale

    h = x_ref[...].astype(jnp.float32)
    h = act_drop(dense(h, w1, b1), 1)
    h = act_drop(dense(h, w2, b2), 2)
    h = act_drop(dense(h, w3, b3), 3)
    h = act_drop(dense(h, w4, b4), 4)
    h = jnp.maximum(dense(h, w5, b5), 0.0)   # final ReLU, no dropout
    o_ref[...] = h.astype(o_ref.dtype)


def eight_pick_encoder(x, params, seed, *, training=True, tile_b=512,
                       use_bf16=False):
    """params = [(w1, b1), ..., (w5, b5)]; x: (B, 8); seed: python int."""
    x = jnp.asarray(x, jnp.float32)
    B, f_in = x.shape
    assert f_in == LAYER_SIZES[0]
    out_dim = LAYER_SIZES[-1]

    # Tile choice: whole batch in one block for small B, otherwise big tiles
    # (multiples of 8 for the sublane constraint; 512+ amortizes the ~0.35us
    # per-grid-step pipeline overhead and feeds the MXU with >=128 rows).
    tile_b = int(min(tile_b, B))
    pad = (-B) % tile_b
    if pad:
        x = jnp.pad(x, ((0, pad), (0, 0)))
    bp = B + pad
    if bp > tile_b:
        assert tile_b % 8 == 0, "tile_b must be a multiple of 8 when tiling"

    flat_params = []
    in_specs = [pl.BlockSpec((tile_b, f_in), lambda i, *_: (i, 0))]
    for (w, b) in params:
        w = w.astype(jnp.bfloat16) if use_bf16 else w.astype(jnp.float32)
        b2d = jnp.asarray(b, jnp.float32).reshape(1, -1)
        flat_params += [w, b2d]
        in_specs.append(pl.BlockSpec(w.shape, lambda i, *_: (0, 0)))
        in_specs.append(pl.BlockSpec(b2d.shape, lambda i, *_: (0, 0)))

    flops_per_row = 2 * sum(a * b for a, b in zip(LAYER_SIZES[:-1], LAYER_SIZES[1:]))
    weight_bytes = 4 * sum(int(w.size) + int(b.size) for w, b in params)
    cost = pl.CostEstimate(
        flops=int(bp) * flops_per_row,
        transcendentals=0,
        bytes_accessed=int(bp) * (f_in + out_dim) * 4 + weight_bytes,
    )

    kernel = functools.partial(_mlp_kernel, training=training)
    seed_arr = jnp.asarray([seed], dtype=jnp.int32)

    out = pl.pallas_call(
        kernel,
        out_shape=jax.ShapeDtypeStruct((bp, out_dim), jnp.float32),
        grid_spec=pltpu.PrefetchScalarGridSpec(
            num_scalar_prefetch=1,
            grid=(bp // tile_b,),
            in_specs=in_specs,
            out_specs=pl.BlockSpec((tile_b, out_dim), lambda i, *_: (i, 0)),
        ),
        compiler_params=pltpu.CompilerParams(
            dimension_semantics=("parallel",)),   # batch tiles are independent
        cost_estimate=cost,
    )(seed_arr, x, *flat_params)
    return out[:B] if pad else out


def make_params(key):
    """Deterministic Xavier-uniform weights, zero biases (shapes from __init__)."""
    params = []
    for fan_in, fan_out in zip(LAYER_SIZES[:-1], LAYER_SIZES[1:]):
        key, wk = jax.random.split(key)
        limit = float(np.sqrt(6.0 / (fan_in + fan_out)))
        w = jax.random.uniform(wk, (fan_in, fan_out), jnp.float32, -limit, limit)
        b = jnp.zeros((fan_out,), jnp.float32)
        params.append((w, b))
    return params


def _reference_eval(x, params):
    """Pure-JAX reference forward with dropout disabled (eval mode)."""
    h = x
    for i, (w, b) in enumerate(params):
        h = h @ w + b
        if i < len(params) - 1:
            h = jnp.where(h > 0, h, NEG_SLOPE * h)
        else:
            h = jnp.maximum(h, 0.0)
    return h


if __name__ == "__main__":
    key = jax.random.PRNGKey(0)
    key, xk = jax.random.split(key)
    params = make_params(key)

    B = 16
    x = jax.random.normal(xk, (B, LAYER_SIZES[0]), jnp.float32)

    # 1) eval-mode (dropout off) matches the pure-JAX reference, single block.
    out_eval = jax.block_until_ready(
        eight_pick_encoder(x, params, seed=0, training=False))
    np.testing.assert_allclose(np.asarray(out_eval),
                               np.asarray(_reference_eval(x, params)),
                               rtol=1e-5, atol=1e-5)

    # 2) multi-block path (grid > 1, "parallel" batch axis) also matches.
    xb = jax.random.normal(jax.random.PRNGKey(1), (64, LAYER_SIZES[0]), jnp.float32)
    out_eval2 = jax.block_until_ready(
        eight_pick_encoder(xb, params, seed=0, training=False, tile_b=16))
    np.testing.assert_allclose(np.asarray(out_eval2),
                               np.asarray(_reference_eval(xb, params)),
                               rtol=1e-5, atol=1e-5)

    # 3) faithful-to-module run: F.dropout defaults to training=True, so dropout
    #    is active in forward(). Randomness is a counter-hash PRNG (same
    #    distribution as torch dropout, different bitstream).
    # TODO(synk): switch to pltpu.prng_random_bits when interpret-mode portability
    # of the dropout mask is no longer required.
    out = jax.block_until_ready(
        eight_pick_encoder(x, params, seed=1234, training=True))
    assert out.shape == (B, LAYER_SIZES[-1])
    assert bool(jnp.all(out >= 0.0))  # final ReLU

    print("KERNEL_OK")
</pallas_src>

<mosaic_0001>
module attributes {stable_mosaic.version = 11 : i64} {
  func.func @_mlp_kernel(%arg0: i32, %arg1: memref<1xi32, #tpu.memory_space<smem>>, %arg2: memref<16x8xf32, #tpu.memory_space<vmem>>, %arg3: memref<8x32xf32, #tpu.memory_space<vmem>>, %arg4: memref<1x32xf32, #tpu.memory_space<vmem>>, %arg5: memref<32x64xf32, #tpu.memory_space<vmem>>, %arg6: memref<1x64xf32, #tpu.memory_space<vmem>>, %arg7: memref<64x128xf32, #tpu.memory_space<vmem>>, %arg8: memref<1x128xf32, #tpu.memory_space<vmem>>, %arg9: memref<128x64xf32, #tpu.memory_space<vmem>>, %arg10: memref<1x64xf32, #tpu.memory_space<vmem>>, %arg11: memref<64x30xf32, #tpu.memory_space<vmem>>, %arg12: memref<1x30xf32, #tpu.memory_space<vmem>>, %arg13: memref<16x30xf32, #tpu.memory_space<vmem>>) attributes {dimension_semantics = [#tpu.dimension_semantics<parallel>], iteration_bounds = array<i64: 1>, scalar_prefetch = 1 : i64, scratch_operands = 0 : i64, tpu.core_type = #tpu.core_type<tc>, window_params = [{transform_indices = @transform_0, window_bounds = array<i64: 16, 8>}, {pipeline_mode = #tpu.pipeline_mode<synchronous>, transform_indices = @transform_1, window_bounds = array<i64: 8, 32>}, {pipeline_mode = #tpu.pipeline_mode<synchronous>, transform_indices = @transform_2, window_bounds = array<i64: 1, 32>}, {pipeline_mode = #tpu.pipeline_mode<synchronous>, transform_indices = @transform_3, window_bounds = array<i64: 32, 64>}, {pipeline_mode = #tpu.pipeline_mode<synchronous>, transform_indices = @transform_4, window_bounds = array<i64: 1, 64>}, {pipeline_mode = #tpu.pipeline_mode<synchronous>, transform_indices = @transform_5, window_bounds = array<i64: 64, 128>}, {pipeline_mode = #tpu.pipeline_mode<synchronous>, transform_indices = @transform_6, window_bounds = array<i64: 1, 128>}, {pipeline_mode = #tpu.pipeline_mode<synchronous>, transform_indices = @transform_7, window_bounds = array<i64: 128, 64>}, {pipeline_mode = #tpu.pipeline_mode<synchronous>, transform_indices = @transform_8, window_bounds = array<i64: 1, 64>}, {pipeline_mode = #tpu.pipeline_mode<synchronous>, transform_indices = @transform_9, window_bounds = array<i64: 64, 30>}, {pipeline_mode = #tpu.pipeline_mode<synchronous>, transform_indices = @transform_10, window_bounds = array<i64: 1, 30>}, {transform_indices = @transform_11, window_bounds = array<i64: 16, 30>}]} {
    %c0 = arith.constant 0 : index
    %c0_0 = arith.constant 0 : index
    %0 = vector.load %arg2[%c0, %c0_0] : memref<16x8xf32, #tpu.memory_space<vmem>>, vector<16x8xf32>
    %c0_1 = arith.constant 0 : index
    %c0_2 = arith.constant 0 : index
    %1 = vector.load %arg3[%c0_1, %c0_2] : memref<8x32xf32, #tpu.memory_space<vmem>>, vector<8x32xf32>
    %cst = arith.constant dense<0.000000e+00> : vector<16x32xf32>
    %2 = tpu.matmul %0, %1, %cst {dimension_numbers = #tpu.dot_dimension_numbers<[1], [0], [0], [1], [0, 0, 1, 1], [], []>} : vector<16x8xf32>, vector<8x32xf32>, vector<16x32xf32> -> vector<16x32xf32>
    %c0_3 = arith.constant 0 : index
    %c0_4 = arith.constant 0 : index
    %3 = vector.load %arg4[%c0_3, %c0_4] : memref<1x32xf32, #tpu.memory_space<vmem>>, vector<1x32xf32>
    %4 = vector.broadcast %3 : vector<1x32xf32> to vector<16x32xf32>
    %5 = arith.addf %2, %4 : vector<16x32xf32>
    %cst_5 = arith.constant 0.000000e+00 : f32
    %6 = vector.broadcast %cst_5 : f32 to vector<16x32xf32>
    %7 = arith.cmpf ogt, %5, %6 : vector<16x32xf32>
    %cst_6 = arith.constant 3.000000e-01 : f32
    %8 = vector.broadcast %cst_6 : f32 to vector<16x32xf32>
    %9 = arith.mulf %8, %5 : vector<16x32xf32>
    %10 = arith.select %7, %5, %9 : vector<16x32xi1>, vector<16x32xf32>
    %c0_7 = arith.constant 0 : index
    %c0_8 = arith.constant 0 : index
    %11 = vector.load %arg5[%c0_7, %c0_8] : memref<32x64xf32, #tpu.memory_space<vmem>>, vector<32x64xf32>
    %cst_9 = arith.constant dense<0.000000e+00> : vector<16x64xf32>
    %12 = tpu.matmul %10, %11, %cst_9 {dimension_numbers = #tpu.dot_dimension_numbers<[1], [0], [0], [1], [0, 0, 1, 1], [], []>} : vector<16x32xf32>, vector<32x64xf32>, vector<16x64xf32> -> vector<16x64xf32>
    %c0_10 = arith.constant 0 : index
    %c0_11 = arith.constant 0 : index
    %13 = vector.load %arg6[%c0_10, %c0_11] : memref<1x64xf32, #tpu.memory_space<vmem>>, vector<1x64xf32>
    %14 = vector.broadcast %13 : vector<1x64xf32> to vector<16x64xf32>
    %15 = arith.addf %12, %14 : vector<16x64xf32>
    %cst_12 = arith.constant 0.000000e+00 : f32
    %16 = vector.broadcast %cst_12 : f32 to vector<16x64xf32>
    %17 = arith.cmpf ogt, %15, %16 : vector<16x64xf32>
    %cst_13 = arith.constant 3.000000e-01 : f32
    %18 = vector.broadcast %cst_13 : f32 to vector<16x64xf32>
    %19 = arith.mulf %18, %15 : vector<16x64xf32>
    %20 = arith.select %17, %15, %19 : vector<16x64xi1>, vector<16x64xf32>
    %c0_14 = arith.constant 0 : index
    %c0_15 = arith.constant 0 : index
    %21 = vector.load %arg7[%c0_14, %c0_15] : memref<64x128xf32, #tpu.memory_space<vmem>>, vector<64x128xf32>
    %cst_16 = arith.constant dense<0.000000e+00> : vector<16x128xf32>
    %22 = tpu.matmul %20, %21, %cst_16 {dimension_numbers = #tpu.dot_dimension_numbers<[1], [0], [0], [1], [0, 0, 1, 1], [], []>} : vector<16x64xf32>, vector<64x128xf32>, vector<16x128xf32> -> vector<16x128xf32>
    %c0_17 = arith.constant 0 : index
    %c0_18 = arith.constant 0 : index
    %23 = vector.load %arg8[%c0_17, %c0_18] : memref<1x128xf32, #tpu.memory_space<vmem>>, vector<1x128xf32>
    %24 = vector.broadcast %23 : vector<1x128xf32> to vector<16x128xf32>
    %25 = arith.addf %22, %24 : vector<16x128xf32>
    %cst_19 = arith.constant 0.000000e+00 : f32
    %26 = vector.broadcast %cst_19 : f32 to vector<16x128xf32>
    %27 = arith.cmpf ogt, %25, %26 : vector<16x128xf32>
    %cst_20 = arith.constant 3.000000e-01 : f32
    %28 = vector.broadcast %cst_20 : f32 to vector<16x128xf32>
    %29 = arith.mulf %28, %25 : vector<16x128xf32>
    %30 = arith.select %27, %25, %29 : vector<16x128xi1>, vector<16x128xf32>
    %c0_21 = arith.constant 0 : index
    %c0_22 = arith.constant 0 : index
    %31 = vector.load %arg9[%c0_21, %c0_22] : memref<128x64xf32, #tpu.memory_space<vmem>>, vector<128x64xf32>
    %cst_23 = arith.constant dense<0.000000e+00> : vector<16x64xf32>
    %32 = tpu.matmul %30, %31, %cst_23 {dimension_numbers = #tpu.dot_dimension_numbers<[1], [0], [0], [1], [0, 0, 1, 1], [], []>} : vector<16x128xf32>, vector<128x64xf32>, vector<16x64xf32> -> vector<16x64xf32>
    %c0_24 = arith.constant 0 : index
    %c0_25 = arith.constant 0 : index
    %33 = vector.load %arg10[%c0_24, %c0_25] : memref<1x64xf32, #tpu.memory_space<vmem>>, vector<1x64xf32>
    %34 = vector.broadcast %33 : vector<1x64xf32> to vector<16x64xf32>
    %35 = arith.addf %32, %34 : vector<16x64xf32>
    %cst_26 = arith.constant 0.000000e+00 : f32
    %36 = vector.broadcast %cst_26 : f32 to vector<16x64xf32>
    %37 = arith.cmpf ogt, %35, %36 : vector<16x64xf32>
    %cst_27 = arith.constant 3.000000e-01 : f32
    %38 = vector.broadcast %cst_27 : f32 to vector<16x64xf32>
    %39 = arith.mulf %38, %35 : vector<16x64xf32>
    %40 = arith.select %37, %35, %39 : vector<16x64xi1>, vector<16x64xf32>
    %c0_28 = arith.constant 0 : index
    %c0_29 = arith.constant 0 : index
    %41 = vector.load %arg11[%c0_28, %c0_29] : memref<64x30xf32, #tpu.memory_space<vmem>>, vector<64x30xf32>
    %cst_30 = arith.constant dense<0.000000e+00> : vector<16x30xf32>
    %42 = tpu.matmul %40, %41, %cst_30 {dimension_numbers = #tpu.dot_dimension_numbers<[1], [0], [0], [1], [0, 0, 1, 1], [], []>} : vector<16x64xf32>, vector<64x30xf32>, vector<16x30xf32> -> vector<16x30xf32>
    %c0_31 = arith.constant 0 : index
    %c0_32 = arith.constant 0 : index
    %43 = vector.load %arg12[%c0_31, %c0_32] : memref<1x30xf32, #tpu.memory_space<vmem>>, vector<1x30xf32>
    %44 = vector.broadcast %43 : vector<1x30xf32> to vector<16x30xf32>
    %45 = arith.addf %42, %44 : vector<16x30xf32>
    %cst_33 = arith.constant 0.000000e+00 : f32
    %46 = vector.broadcast %cst_33 : f32 to vector<16x30xf32>
    %47 = arith.maximumf %45, %46 : vector<16x30xf32>
    %c0_34 = arith.constant 0 : index
    %c0_35 = arith.constant 0 : index
    %48 = vector.load %arg13[%c0_34, %c0_35] : memref<16x30xf32, #tpu.memory_space<vmem>>, vector<16x30xf32>
    tpu.vector_store %arg13[%c0_34, %c0_35], %47 {strides = array<i32>} : memref<16x30xf32, #tpu.memory_space<vmem>>, vector<16x30xf32>,
    return
  }
  func.func @transform_0(%arg0: i32, %arg1: memref<1xi32, #tpu.memory_space<smem>>) -> (i32, i32) {
    %c0_i32 = arith.constant 0 : i32
    %c0_i32_0 = arith.constant 0 : i32
    return %arg0, %c0_i32 : i32, i32
  }
  func.func @transform_1(%arg0: i32, %arg1: memref<1xi32, #tpu.memory_space<smem>>) -> (i32, i32) {
    %c0_i32 = arith.constant 0 : i32
    %c0_i32_0 = arith.constant 0 : i32
    %c0_i32_1 = arith.constant 0 : i32
    return %c0_i32, %c0_i32_0 : i32, i32
  }
  func.func @transform_2(%arg0: i32, %arg1: memref<1xi32, #tpu.memory_space<smem>>) -> (i32, i32) {
    %c0_i32 = arith.constant 0 : i32
    %c0_i32_0 = arith.constant 0 : i32
    %c0_i32_1 = arith.constant 0 : i32
    return %c0_i32, %c0_i32_0 : i32, i32
  }
  func.func @transform_3(%arg0: i32, %arg1: memref<1xi32, #tpu.memory_space<smem>>) -> (i32, i32) {
    %c0_i32 = arith.constant 0 : i32
    %c0_i32_0 = arith.constant 0 : i32
    %c0_i32_1 = arith.constant 0 : i32
    return %c0_i32, %c0_i32_0 : i32, i32
  }
  func.func @transform_4(%arg0: i32, %arg1: memref<1xi32, #tpu.memory_space<smem>>) -> (i32, i32) {
    %c0_i32 = arith.constant 0 : i32
    %c0_i32_0 = arith.constant 0 : i32
    %c0_i32_1 = arith.constant 0 : i32
    return %c0_i32, %c0_i32_0 : i32, i32
  }
  func.func @transform_5(%arg0: i32, %arg1: memref<1xi32, #tpu.memory_space<smem>>) -> (i32, i32) {
    %c0_i32 = arith.constant 0 : i32
    %c0_i32_0 = arith.constant 0 : i32
    %c0_i32_1 = arith.constant 0 : i32
    return %c0_i32, %c0_i32_0 : i32, i32
  }
  func.func @transform_6(%arg0: i32, %arg1: memref<1xi32, #tpu.memory_space<smem>>) -> (i32, i32) {
    %c0_i32 = arith.constant 0 : i32
    %c0_i32_0 = arith.constant 0 : i32
    %c0_i32_1 = arith.constant 0 : i32
    return %c0_i32, %c0_i32_0 : i32, i32
  }
  func.func @transform_7(%arg0: i32, %arg1: memref<1xi32, #tpu.memory_space<smem>>) -> (i32, i32) {
    %c0_i32 = arith.constant 0 : i32
    %c0_i32_0 = arith.constant 0 : i32
    %c0_i32_1 = arith.constant 0 : i32
    return %c0_i32, %c0_i32_0 : i32, i32
  }
  func.func @transform_8(%arg0: i32, %arg1: memref<1xi32, #tpu.memory_space<smem>>) -> (i32, i32) {
    %c0_i32 = arith.constant 0 : i32
    %c0_i32_0 = arith.constant 0 : i32
    %c0_i32_1 = arith.constant 0 : i32
    return %c0_i32, %c0_i32_0 : i32, i32
  }
  func.func @transform_9(%arg0: i32, %arg1: memref<1xi32, #tpu.memory_space<smem>>) -> (i32, i32) {
    %c0_i32 = arith.constant 0 : i32
    %c0_i32_0 = arith.constant 0 : i32
    %c0_i32_1 = arith.constant 0 : i32
    return %c0_i32, %c0_i32_0 : i32, i32
  }
  func.func @transform_10(%arg0: i32, %arg1: memref<1xi32, #tpu.memory_space<smem>>) -> (i32, i32) {
    %c0_i32 = arith.constant 0 : i32
    %c0_i32_0 = arith.constant 0 : i32
    %c0_i32_1 = arith.constant 0 : i32
    return %c0_i32, %c0_i32_0 : i32, i32
  }
  func.func @transform_11(%arg0: i32, %arg1: memref<1xi32, #tpu.memory_space<smem>>) -> (i32, i32) {
    %c0_i32 = arith.constant 0 : i32
    %c0_i32_0 = arith.constant 0 : i32
    return %arg0, %c0_i32 : i32, i32
  }
}

</mosaic_0001>

<llo_original>
// kernel: tpu_custom_call.1
$region0: #{tpu_custom_call.1}
  #allocation0 [shape = 'u32[]', space=smem, size = 0x4, offset = 0x4, fixed_abs, tag = 'smem constant byte address 0x4 - core index']
  #allocation1 [shape = 'u32[72,128]{1,0:T(1,128)}', space=vmem, size = 0x9000, scoped, tag = 'internal scratch']
  #allocation2 [shape = 's32[1]{0}', space=sflag, size = 0x4, scoped, tag = 'scoped memory for tpu_custom_call.1']
  #allocation3 [shape = 's32[1]{0:T(128)S(6)}', space=smem, size = 0x200, scoped, tag = 'prefetched SMEM operand 0']
  %s0 = inlined_call_operand.<no memory space> [shape: s32[1], index: 0, kind: input, shape index: {}]
  %s1 = inlined_call_operand.vmem [shape: f32[16,8], index: 1, kind: input, shape index: {}]
  %s2 = inlined_call_operand.vmem [shape: f32[8,32], index: 2, kind: input, shape index: {}]
  %s3 = inlined_call_operand.vmem [shape: f32[1,32], index: 3, kind: input, shape index: {}]
  %s4 = inlined_call_operand.vmem [shape: f32[32,64], index: 4, kind: input, shape index: {}]
  %s5 = inlined_call_operand.vmem [shape: f32[1,64], index: 5, kind: input, shape index: {}]
  %s6 = inlined_call_operand.vmem [shape: f32[64,128], index: 6, kind: input, shape index: {}]
  %s7 = inlined_call_operand.vmem [shape: f32[1,128], index: 7, kind: input, shape index: {}]
  %s8 = inlined_call_operand.vmem [shape: f32[128,64], index: 8, kind: input, shape index: {}]
  %s9 = inlined_call_operand.vmem [shape: f32[1,64], index: 9, kind: input, shape index: {}]
  %s10 = inlined_call_operand.vmem [shape: f32[64,30], index: 10, kind: input, shape index: {}]
  %s11 = inlined_call_operand.vmem [shape: f32[1,30], index: 11, kind: input, shape index: {}]
  %s12 = inlined_call_operand.hbm [shape: f32[16,30], index: 12, kind: output, shape index: {}]
  %s13 = sld [smem:[#allocation0]]
  $region54: #{tpu_custom_call.1} parent=0
    _
  %s15 = ssub.s32 1, %s13
  %s16 = scalar_select 0, %s15, %s13
  %17 = sst [smem:[#allocation3]] %s0
  $region1: #{tpu_custom_call.1} parent=0
    #allocation4 [shape = 'u8[8192]{0}', space=vmem, size = 0x2000, scoped, tag = 'output window, operand 0, single buffered']
    #allocation5 [shape = 's32[1]{0}', space=sflag, size = 0x4, scoped, tag = 'scoped memory for tpu_custom_call.1']
    %18 = vsyncpa [#allocation5], 0
    // Predicated region
    $region2: #{tpu_custom_call.1} parent=1 // pred_check
      _
    $region3: #{tpu_custom_call.1} parent=1 // pred_check_branch
      %20 = sbr.rel (0) target = $region5
    $region4: #{tpu_custom_call.1} parent=1 // pred_region
      _
    $region5: #{tpu_custom_call.1} parent=1 // pred_fallthru
      _
    // Predicated region
    $region6: #{tpu_custom_call.1} parent=1 // pred_check
      _
    $region7: #{tpu_custom_call.1} parent=1 // pred_check_branch
      %22 = sbr.rel (0) target = $region9
    $region8: #{tpu_custom_call.1} parent=1 // pred_region
      _
    $region9: #{tpu_custom_call.1} parent=1 // pred_fallthru
      _
    // Predicated region
    $region10: #{tpu_custom_call.1} parent=1 // pred_check
      _
    $region11: #{tpu_custom_call.1} parent=1 // pred_check_branch
      %24 = sbr.rel (0) target = $region13
    $region12: #{tpu_custom_call.1} parent=1 // pred_region
      _
    $region13: #{tpu_custom_call.1} parent=1 // pred_fallthru
      _
    // Predicated region
    $region14: #{tpu_custom_call.1} parent=1 // pred_check
      _
    $region15: #{tpu_custom_call.1} parent=1 // pred_check_branch
      %26 = sbr.rel (0) target = $region17
    $region16: #{tpu_custom_call.1} parent=1 // pred_region
      _
    $region17: #{tpu_custom_call.1} parent=1 // pred_fallthru
      _
    // Predicated region
    $region18: #{tpu_custom_call.1} parent=1 // pred_check
      _
    $region19: #{tpu_custom_call.1} parent=1 // pred_check_branch
      %28 = sbr.rel (0) target = $region21
    $region20: #{tpu_custom_call.1} parent=1 // pred_region
      _
    $region21: #{tpu_custom_call.1} parent=1 // pred_fallthru
      _
    // Predicated region
    $region22: #{tpu_custom_call.1} parent=1 // pred_check
      _
    $region23: #{tpu_custom_call.1} parent=1 // pred_check_branch
      %30 = sbr.rel (0) target = $region25
    $region24: #{tpu_custom_call.1} parent=1 // pred_region
      _
    $region25: #{tpu_custom_call.1} parent=1 // pred_fallthru
      _
    // Predicated region
    $region26: #{tpu_custom_call.1} parent=1 // pred_check
      _
    $region27: #{tpu_custom_call.1} parent=1 // pred_check_branch
      %32 = sbr.rel (0) target = $region29
    $region28: #{tpu_custom_call.1} parent=1 // pred_region
      _
    $region29: #{tpu_custom_call.1} parent=1 // pred_fallthru
      _
    // Predicated region
    $region30: #{tpu_custom_call.1} parent=1 // pred_check
      _
    $region31: #{tpu_custom_call.1} parent=1 // pred_check_branch
      %34 = sbr.rel (0) target = $region33
    $region32: #{tpu_custom_call.1} parent=1 // pred_region
      _
    $region33: #{tpu_custom_call.1} parent=1 // pred_fallthru
      _
    // Predicated region
    $region34: #{tpu_custom_call.1} parent=1 // pred_check
      _
    $region35: #{tpu_custom_call.1} parent=1 // pred_check_branch
      %36 = sbr.rel (0) target = $region37
    $region36: #{tpu_custom_call.1} parent=1 // pred_region
      _
    $region37: #{tpu_custom_call.1} parent=1 // pred_fallthru
      _
    // Predicated region
    $region38: #{tpu_custom_call.1} parent=1 // pred_check
      _
    $region39: #{tpu_custom_call.1} parent=1 // pred_check_branch
      %38 = sbr.rel (0) target = $region41
    $region40: #{tpu_custom_call.1} parent=1 // pred_region
      _
    $region41: #{tpu_custom_call.1} parent=1 // pred_fallthru
      _
    // Predicated region
    $region42: #{tpu_custom_call.1} parent=1 // pred_check
      _
    $region43: #{tpu_custom_call.1} parent=1 // pred_check_branch
      %40 = sbr.rel (0) target = $region45
    $region44: #{tpu_custom_call.1} parent=1 // pred_region
      _
    $region45: #{tpu_custom_call.1} parent=1 // pred_fallthru
      _
    %v41 = vld [vmem:[%s1] sm:$0xff]
    %v42 = vld [vmem:[%s1 + $0x8] sm:$0xff]
    %v43 = vld [vmem:[%s2] sm:$0xff]
    %v44 = vld [vmem:[%s3] sm:$0x1]
    %v46 = vperm.slane %v44, 0
    %vm48 = vcmask 64512
    %v50 = vsel %vm48, %v41, 0
    %v53 = vsel %vm48, %v42, 0
    %55 = vmatpush.msra.mxu0 0.0
    %56 = vmatpush.msra.mxu0 0.0
    %57 = vmatpush.msra.mxu0 0.0
    %58 = vmatpush.msra.mxu0 0.0
    %59 = vmatpush.msra.mxu0 0.0
    %60 = vmatpush.msra.mxu0 0.0
    %61 = vmatpush.msra.mxu0 0.0
    %62 = vmatpush.msra.mxu0 0.0
    %63 = vmatpush.msra.mxu0 0.0
    %64 = vmatpush.msra.mxu0 0.0
    %65 = vmatpush.msra.mxu0 0.0
    %66 = vmatpush.msra.mxu0 0.0
    %67 = vmatpush.msra.mxu0 0.0
    %68 = vmatpush.msra.mxu0 0.0
    %69 = vmatpush.msra.mxu0 0.0
    %70 = vmatpush.msra.mxu0 %v43
    %71 = vmatmul.f32.gmra.mxu0 %v50
    %v72 = vpop.f32.mrf.mxu0
    %v73 = vadd.f32 %v46, %v72
    %74 = vmatmul.f32.gmra.mxu0 %v53
    %v75 = vpop.f32.mrf.mxu0
    %v76 = vadd.f32 %v46, %v75
    %77 = vdwg.mxu0
    %vm78 = vcmp.gt.f32.partialorder %v73, 0.0
    %vm79 = vcmp.gt.f32.partialorder %v76, 0.0
    %v80 = vmul.f32 %v73, 0.3
    %v81 = vmul.f32 %v76, 0.3
    %v82 = vsel %vm78, %v73, %v80
    %v83 = vsel %vm79, %v76, %v81
    %v84 = vld [vmem:[%s4] sm:$0xff]
    %v85 = vld [vmem:[%s4 + $0x8] sm:$0xff]
    %v86 = vld [vmem:[%s4 + $0x10] sm:$0xff]
    %v87 = vld [vmem:[%s4 + $0x18] sm:$0xff]
    %v88 = vld [vmem:[%s5] sm:$0x1]
    %v90 = vperm.slane %v88, 0
    %vm92 = vcmask 261120
    %v94 = vsel %vm92, %v82, 0
    %v97 = vsel %vm92, %v83, 0
    %99 = vmatpush.msra.mxu0 0.0
    %100 = vmatpush.msra.mxu0 0.0
    %101 = vmatpush.msra.mxu0 0.0
    %102 = vmatpush.msra.mxu0 0.0
    %103 = vmatpush.msra.mxu0 0.0
    %104 = vmatpush.msra.mxu0 0.0
    %105 = vmatpush.msra.mxu0 0.0
    %106 = vmatpush.msra.mxu0 0.0
    %107 = vmatpush.msra.mxu0 0.0
    %108 = vmatpush.msra.mxu0 0.0
    %109 = vmatpush.msra.mxu0 0.0
    %110 = vmatpush.msra.mxu0 0.0
    %111 = vmatpush.msra.mxu0 %v87
    %112 = vmatpush.msra.mxu0 %v86
    %113 = vmatpush.msra.mxu0 %v85
    %114 = vmatpush.msra.mxu0 %v84
    %115 = vmatmul.f32.gmra.mxu0 %v94
    %v116 = vpop.f32.mrf.mxu0
    %v117 = vadd.f32 %v90, %v116
    %118 = vmatmul.f32.gmra.mxu0 %v97
    %v119 = vpop.f32.mrf.mxu0
    %v120 = vadd.f32 %v90, %v119
    %121 = vdwg.mxu0
    %vm122 = vcmp.gt.f32.partialorder %v117, 0.0
    %vm123 = vcmp.gt.f32.partialorder %v120, 0.0
    %v124 = vmul.f32 %v117, 0.3
    %v125 = vmul.f32 %v120, 0.3
    %v126 = vsel %vm122, %v117, %v124
    %v127 = vsel %vm123, %v120, %v125
    %v128 = vld [vmem:[%s6] sm:$0xff]
    %v129 = vld [vmem:[%s6 + $0x8] sm:$0xff]
    %v130 = vld [vmem:[%s6 + $0x10] sm:$0xff]
    %v131 = vld [vmem:[%s6 + $0x18] sm:$0xff]
    %v132 = vld [vmem:[%s6 + $0x20] sm:$0xff]
    %v133 = vld [vmem:[%s6 + $0x28] sm:$0xff]
    %v134 = vld [vmem:[%s6 + $0x30] sm:$0xff]
    %v135 = vld [vmem:[%s6 + $0x38] sm:$0xff]
    %v136 = vld [vmem:[%s7] sm:$0x1]
    %v138 = vperm.slane %v136, 0
    %vm140 = vcmask 523264
    %v142 = vsel %vm140, %v126, 0
    %v145 = vsel %vm140, %v127, 0
    %147 = vmatpush.msra.mxu0 0.0
    %148 = vmatpush.msra.mxu0 0.0
    %149 = vmatpush.msra.mxu0 0.0
    %150 = vmatpush.msra.mxu0 0.0
    %151 = vmatpush.msra.mxu0 0.0
    %152 = vmatpush.msra.mxu0 0.0
    %153 = vmatpush.msra.mxu0 0.0
    %154 = vmatpush.msra.mxu0 0.0
    %155 = vmatpush.msra.mxu0 %v135
    %156 = vmatpush.msra.mxu0 %v134
    %157 = vmatpush.msra.mxu0 %v133
    %158 = vmatpush.msra.mxu0 %v132
    %159 = vmatpush.msra.mxu0 %v131
    %160 = vmatpush.msra.mxu0 %v130
    %161 = vmatpush.msra.mxu0 %v129
    %162 = vmatpush.msra.mxu0 %v128
    %163 = vmatmul.f32.gmra.mxu0 %v142
    %v164 = vpop.f32.mrf.mxu0
    %v165 = vadd.f32 %v138, %v164
    %166 = vmatmul.f32.gmra.mxu0 %v145
    %v167 = vpop.f32.mrf.mxu0
    %v168 = vadd.f32 %v138, %v167
    %169 = vdwg.mxu0
    %vm170 = vcmp.gt.f32.partialorder %v165, 0.0
    %vm171 = vcmp.gt.f32.partialorder %v168, 0.0
    %v172 = vmul.f32 %v165, 0.3
    %v173 = vmul.f32 %v168, 0.3
    %v174 = vsel %vm170, %v165, %v172
    %v175 = vsel %vm171, %v168, %v173
    %v176 = vld [vmem:[%s8] sm:$0xff]
    %v177 = vld [vmem:[%s8 + $0x8] sm:$0xff]
    %v178 = vld [vmem:[%s8 + $0x10] sm:$0xff]
    %v179 = vld [vmem:[%s8 + $0x18] sm:$0xff]
    %v180 = vld [vmem:[%s8 + $0x20] sm:$0xff]
    %v181 = vld [vmem:[%s8 + $0x28] sm:$0xff]
    %v182 = vld [vmem:[%s8 + $0x30] sm:$0xff]
    %v183 = vld [vmem:[%s8 + $0x38] sm:$0xff]
    %v184 = vld [vmem:[%s8 + $0x40] sm:$0xff]
    %v185 = vld [vmem:[%s8 + $0x48] sm:$0xff]
    %v186 = vld [vmem:[%s8 + $0x50] sm:$0xff]
    %v187 = vld [vmem:[%s8 + $0x58] sm:$0xff]
    %v188 = vld [vmem:[%s8 + $0x60] sm:$0xff]
    %v189 = vld [vmem:[%s8 + $0x68] sm:$0xff]
    %v190 = vld [vmem:[%s8 + $0x70] sm:$0xff]
    %v191 = vld [vmem:[%s8 + $0x78] sm:$0xff]
    %v192 = vld [vmem:[%s9] sm:$0x1]
    %v194 = vperm.slane %v192, 0
    %196 = vmatpush.msra.mxu0 %v191
    %197 = vmatpush.msra.mxu0 %v190
    %198 = vmatpush.msra.mxu0 %v189
    %199 = vmatpush.msra.mxu0 %v188
    %200 = vmatpush.msra.mxu0 %v187
    %201 = vmatpush.msra.mxu0 %v186
    %202 = vmatpush.msra.mxu0 %v185
    %203 = vmatpush.msra.mxu0 %v184
    %204 = vmatpush.msra.mxu0 %v183
    %205 = vmatpush.msra.mxu0 %v182
    %206 = vmatpush.msra.mxu0 %v181
    %207 = vmatpush.msra.mxu0 %v180
    %208 = vmatpush.msra.mxu0 %v179
    %209 = vmatpush.msra.mxu0 %v178
    %210 = vmatpush.msra.mxu0 %v177
    %211 = vmatpush.msra.mxu0 %v176
    %212 = vmatmul.f32.gmra.mxu0 %v174
    %v213 = vpop.f32.mrf.mxu0
    %v214 = vadd.f32 %v194, %v213
    %215 = vmatmul.f32.gmra.mxu0 %v175
    %v216 = vpop.f32.mrf.mxu0
    %v217 = vadd.f32 %v194, %v216
    %218 = vdwg.mxu0
    %vm219 = vcmp.gt.f32.partialorder %v214, 0.0
    %vm220 = vcmp.gt.f32.partialorder %v217, 0.0
    %v221 = vmul.f32 %v214, 0.3
    %v222 = vmul.f32 %v217, 0.3
    %v223 = vsel %vm219, %v214, %v221
    %v224 = vsel %vm220, %v217, %v222
    %v225 = vld [vmem:[%s10] sm:$0xff]
    %v226 = vld [vmem:[%s10 + $0x8] sm:$0xff]
    %v227 = vld [vmem:[%s10 + $0x10] sm:$0xff]
    %v228 = vld [vmem:[%s10 + $0x18] sm:$0xff]
    %v229 = vld [vmem:[%s10 + $0x20] sm:$0xff]
    %v230 = vld [vmem:[%s10 + $0x28] sm:$0xff]
    %v231 = vld [vmem:[%s10 + $0x30] sm:$0xff]
    %v232 = vld [vmem:[%s10 + $0x38] sm:$0xff]
    %v233 = vld [vmem:[%s11] sm:$0x1]
    %v235 = vperm.slane %v233, 0
    %v238 = vsel %vm140, %v223, 0
    %v241 = vsel %vm140, %v224, 0
    %243 = vmatpush.msra.mxu0 0.0
    %244 = vmatpush.msra.mxu0 0.0
    %245 = vmatpush.msra.mxu0 0.0
    %246 = vmatpush.msra.mxu0 0.0
    %247 = vmatpush.msra.mxu0 0.0
    %248 = vmatpush.msra.mxu0 0.0
    %249 = vmatpush.msra.mxu0 0.0
    %250 = vmatpush.msra.mxu0 0.0
    %251 = vmatpush.msra.mxu0 %v232
    %252 = vmatpush.msra.mxu0 %v231
    %253 = vmatpush.msra.mxu0 %v230
    %254 = vmatpush.msra.mxu0 %v229
    %255 = vmatpush.msra.mxu0 %v228
    %256 = vmatpush.msra.mxu0 %v227
    %257 = vmatpush.msra.mxu0 %v226
    %258 = vmatpush.msra.mxu0 %v225
    %259 = vmatmul.f32.gmra.mxu0 %v238
    %v260 = vpop.f32.mrf.mxu0
    %v261 = vadd.f32 %v235, %v260
    %262 = vmatmul.f32.gmra.mxu0 %v241
    %v263 = vpop.f32.mrf.mxu0
    %v264 = vadd.f32 %v235, %v263
    %265 = vdwg.mxu0
    %v266 = vmax.f32 %v261, 0.0
    %v267 = vmax.f32 %v264, 0.0
    %vm268 = vcmask 244736
    %269 = vst.msk [vmem:[#allocation4] sm:$0xff] %vm268, %v266
    %270 = vst.msk [vmem:[#allocation4 + $0x8] sm:$0xff] %vm268, %v267
    // Predicated region
    $region46: #{tpu_custom_call.1} parent=1 // pred_check
      _
    $region47: #{tpu_custom_call.1} parent=1 // pred_check_branch
      %272 = sbr.rel (0) target = $region49
    $region48: #{tpu_custom_call.1} parent=1 // pred_region
      %274 = vsyncadd [#allocation5], 0
      %s275 = sshll.u32 [#allocation4], 4
      %s276 = int_to_ptr.vmem [resolvable:$true] %s275
      %s277 = sshll.u32 %s12, 4
      %s278 = int_to_ptr.hbm [resolvable:$true] %s277
      %283 = dma.vmem_to_hbm [thread:$0]  %s276, 256, %s278, [#allocation5], 128, 128, 8
    $region49: #{tpu_custom_call.1} parent=1 // pred_fallthru
      _
    // Predicated region
    $region50: #{tpu_custom_call.1} parent=1 // pred_check
      _
    $region51: #{tpu_custom_call.1} parent=1 // pred_check_branch
      %285 = sbr.rel (0) target = $region53
    $region52: #{tpu_custom_call.1} parent=1 // pred_region
      %287 = dma.done [#allocation5], 256
    $region53: #{tpu_custom_call.1} parent=1 // pred_fallthru
      _
    %288 = vsyncpa [#allocation5], 1

</llo_original>
